<compile_context>
chip_gen: v7x
topology: tpu7x:2x2x1
jax: 0.10.0
libtpu: 0.0.40
codegen_flags: <defaults>
</compile_context>

<pallas_src>
import jax
import jax.numpy as jnp
from jax.experimental import pallas as pl
from jax.experimental.pallas import tpu as pltpu


def _round_up(v, m):
    return -(-v // m) * m


def _choose_row_tile(n_batch, n_rows, lanes_in, lanes_out, itemsize,
                     vmem_budget=10 * 1024 * 1024):
    """Largest row tile (multiple of 8 dividing n_rows, or n_rows itself) whose
    double-buffered in+out VMEM footprint fits the budget, preferring >=4
    (else >=2) total grid steps for pipelining / megacore."""
    def footprint(tr):
        pad = lambda r, l: _round_up(r, 8) * _round_up(l, 128) * itemsize
        return 2 * (pad(tr, lanes_in) + pad(tr, lanes_out))   # double-buffered

    cands = sorted({d for d in range(8, n_rows + 1, 8) if n_rows % d == 0}
                   | {n_rows}, reverse=True)
    under = [d for d in cands if footprint(d) <= vmem_budget] or [cands[-1]]
    for min_steps in (4, 2, 1):
        for d in under:                        # descending: largest tile first
            if n_batch * (n_rows // d) >= min_steps:
                return d
    return under[0]


def _maxpool_rows_kernel(x_ref, o_ref):
    # x_ref: (1, TR, 2*W) -- each row = [H-even row | H-odd row] of one (c, ho) band
    # o_ref: (1, TR, W-1) -- lane-neighbour max; even lanes hold the pooled output
    W = x_ref.shape[-1] // 2
    v = x_ref[0]
    h = jnp.maximum(v[:, :W], v[:, W:])              # pool over the H pair
    o_ref[0] = jnp.maximum(h[:, :W - 1], h[:, 1:])   # pool over W neighbours


def maxpool2d_2x2(x_nchw):
    """2x2 / stride-2 max pooling; input & output NCHW (matches nn.MaxPool2d)."""
    N, C, H, W = x_nchw.shape
    assert H % 2 == 0 and W % 2 == 0, "ceil_mode=False with even spatial dims"
    Ho, Wo = H // 2, W // 2
    R = C * Ho                                   # independent pooling bands
    itemsize = jnp.dtype(x_nchw.dtype).itemsize

    # Pure metadata reshape: no HBM data movement.
    x_rows = x_nchw.reshape(N, R, 2 * W)

    TR = _choose_row_tile(N, R, 2 * W, W - 1, itemsize)
    grid = (N, R // TR)

    bytes_accessed = (N * R * 2 * W + N * R * (W - 1)) * itemsize
    y = pl.pallas_call(
        _maxpool_rows_kernel,
        out_shape=jax.ShapeDtypeStruct((N, R, W - 1), x_nchw.dtype),
        grid=grid,
        in_specs=[pl.BlockSpec((1, TR, 2 * W), lambda n, r: (n, r, 0))],
        out_specs=pl.BlockSpec((1, TR, W - 1), lambda n, r: (n, r, 0)),
        compiler_params=pltpu.CompilerParams(
            dimension_semantics=("parallel", "parallel")),
        cost_estimate=pl.CostEstimate(
            flops=2 * N * R * (W - 1),
            transcendentals=0,
            bytes_accessed=bytes_accessed),
    )(x_rows)

    # Final de-interleave (take even lanes) + pack, handled by XLA in one small
    # output-sized pass; far cheaper than the two full NCHW<->NHWC transposes.
    return y[..., 0::2].reshape(N, C, Ho, Wo)


def _reference(x):
    N, C, H, W = x.shape
    return x.reshape(N, C, H // 2, 2, W // 2, 2).max(axis=(3, 5))


if __name__ == "__main__":
    key = jax.random.PRNGKey(0)
    pool = jax.jit(maxpool2d_2x2)

    # Small shapes consistent with the module's forward (original: 1x512x28x28).
    for shape in [(2, 4, 16, 16), (1, 8, 28, 28)]:
        key, sub = jax.random.split(key)
        x = jax.random.normal(sub, shape, dtype=jnp.float32)
        out = jax.block_until_ready(pool(x))
        ref = _reference(x)
        assert out.shape == ref.shape, f"shape mismatch for {shape}"
        assert out.dtype == x.dtype, f"dtype mismatch for {shape}"
        assert jnp.allclose(out, ref), f"value mismatch vs reference for {shape}"
    print("KERNEL_OK")
</pallas_src>

<mosaic_0001>
module attributes {stable_mosaic.version = 11 : i64} {
  func.func @_maxpool_rows_kernel(%arg0: i32, %arg1: i32, %arg2: memref<1x16x32xf32, #tpu.memory_space<vmem>>, %arg3: memref<1x16x15xf32, #tpu.memory_space<vmem>>) attributes {dimension_semantics = [#tpu.dimension_semantics<parallel>, #tpu.dimension_semantics<parallel>], iteration_bounds = array<i64: 2, 2>, scalar_prefetch = 0 : i64, scratch_operands = 0 : i64, tpu.core_type = #tpu.core_type<tc>, window_params = [{transform_indices = @transform_0, window_bounds = array<i64: 1, 16, 32>}, {transform_indices = @transform_1, window_bounds = array<i64: 1, 16, 15>}]} {
    %c0 = arith.constant 0 : index
    %c0_0 = arith.constant 0 : index
    %c0_1 = arith.constant 0 : index
    %0 = vector.load %arg2[%c0, %c0_0, %c0_1] : memref<1x16x32xf32, #tpu.memory_space<vmem>>, vector<1x16x32xf32>
    %1 = vector.shape_cast %0 : vector<1x16x32xf32> to vector<16x32xf32>
    %2 = vector.extract_strided_slice %1 {offsets = [0, 0], sizes = [16, 16], strides = [1, 1]} : vector<16x32xf32> to vector<16x16xf32>
    %3 = vector.extract_strided_slice %1 {offsets = [0, 16], sizes = [16, 16], strides = [1, 1]} : vector<16x32xf32> to vector<16x16xf32>
    %4 = arith.maximumf %2, %3 : vector<16x16xf32>
    %5 = vector.extract_strided_slice %4 {offsets = [0, 0], sizes = [16, 15], strides = [1, 1]} : vector<16x16xf32> to vector<16x15xf32>
    %6 = vector.extract_strided_slice %4 {offsets = [0, 1], sizes = [16, 15], strides = [1, 1]} : vector<16x16xf32> to vector<16x15xf32>
    %7 = arith.maximumf %5, %6 : vector<16x15xf32>
    %c0_2 = arith.constant 0 : index
    %c0_3 = arith.constant 0 : index
    %c0_4 = arith.constant 0 : index
    %8 = vector.load %arg3[%c0_2, %c0_3, %c0_4] : memref<1x16x15xf32, #tpu.memory_space<vmem>>, vector<1x16x15xf32>
    %9 = vector.shape_cast %8 : vector<1x16x15xf32> to vector<16x15xf32>
    %10 = vector.shape_cast %7 : vector<16x15xf32> to vector<1x16x15xf32>
    tpu.vector_store %arg3[%c0_2, %c0_3, %c0_4], %10 {strides = array<i32>} : memref<1x16x15xf32, #tpu.memory_space<vmem>>, vector<1x16x15xf32>,
    return
  }
  func.func @transform_0(%arg0: i32, %arg1: i32) -> (i32, i32, i32) {
    %c0_i32 = arith.constant 0 : i32
    %c0_i32_0 = arith.constant 0 : i32
    return %arg0, %arg1, %c0_i32 : i32, i32, i32
  }
  func.func @transform_1(%arg0: i32, %arg1: i32) -> (i32, i32, i32) {
    %c0_i32 = arith.constant 0 : i32
    %c0_i32_0 = arith.constant 0 : i32
    return %arg0, %arg1, %c0_i32 : i32, i32, i32
  }
}

</mosaic_0001>

<llo_original>
// kernel: maxpool2d_2x2.1
$region0: #{maxpool2d_2x2.1}
  #allocation0 [shape = 'u32[]', space=smem, size = 0x4, offset = 0x4, fixed_abs, tag = 'smem constant byte address 0x4 - core index']
  #allocation1 [shape = 'u32[144,128]{1,0:T(1,128)}', space=vmem, size = 0x12000, scoped, tag = 'internal scratch']
  %s0 = inlined_call_operand.vmem [shape: f32[2,32,32], index: 0, kind: input, shape index: {}]
  %s1 = inlined_call_operand.vmem [shape: f32[2,32,15], index: 1, kind: output, shape index: {}]
  %s2 = sld [smem:[#allocation0]]
  $region37: #{maxpool2d_2x2.1} parent=0
    _
  %s4 = ssub.s32 1, %s2
  %s5 = scalar_select 0, %s4, %s2
  loop: start=0, step=1, limit=6
  $region2: #{maxpool2d_2x2.1} parent=0 // loop_pre_header
    _
  $region3: #{maxpool2d_2x2.1} parent=0 // loop_header
    %s7 = sphi 0, %s11
    %p8 = scmp.ge.s32.totalorder %s7, 6
    %s14 = sphi 0, %s26
    %s15 = sphi 0, %s22
    %s16 = sphi 0, %s14
    %s17 = sphi 0, %s15
    %s18 = sphi 0, %s16
    %s19 = sphi 0, %s17
    %s31 = sphi 0, %s33
    %s34 = sphi 0, %s31
    %s35 = sphi 0, %s34
    %s51 = sphi 0, %s35
    %s59 = sphi 0, %s61
    %s62 = sphi 0, %s59
    %s63 = sphi 0, %s62
    %s79 = sphi 0, %s63
  $region4: #{maxpool2d_2x2.1} parent=0 // loop_header_branch
    %10 = sbr.rel (%p8) target = $region8
  $region5: #{maxpool2d_2x2.1} parent=0 // loop_body
    %s12 = ssub.s32 %s7, 1
    %s13 = ssub.s32 %s7, 2
    %s20 = sadd.s32 1, %s15
    %p21 = scmp.ge.s32.totalorder %s20, 2
    %s22 = scalar_select %p21, 0, %s20
    %s23 = sadd.s32 1, %s14
    %s24 = scalar_select %p21, %s23, %s14
    %p25 = scmp.ge.s32.totalorder %s24, 2
    %s26 = scalar_select %p25, 0, %s24
    %s27 = ssub.s32 %s14, %s26
    %s28 = ssub.s32 %s15, %s22
    %s29 = sor.u32 %s27, %s28
    %p30 = scmp.eq.s32.totalorder %s29, 0
    %s32 = sadd.s32 %s31, 1
    %s33 = scalar_select %p30, %s31, %s32
    %p36 = pneg %p30
    %p37 = scmp.eq.s32.totalorder %s7, 3
    %p38 = por %p36, %p37
    %p39 = scmp.ne.s32.totalorder %s31, %s34
    %p40 = scmp.eq.s32.totalorder %s7, 0
    %p41 = por %p39, %p40
    %p42 = scmp.ne.s32.totalorder %s31, %s34
    %p43 = scmp.eq.s32.totalorder %s12, 3
    %p44 = por %p42, %p43
    %p45 = scmp.ne.s32.totalorder %s34, %s35
    %p46 = scmp.eq.s32.totalorder %s12, 0
    %p47 = por %p45, %p46
    %p48 = scmp.ne.s32.totalorder %s34, %s35
    %p49 = scmp.eq.s32.totalorder %s13, 3
    %p50 = por %p48, %p49
    %p52 = scmp.ne.s32.totalorder %s35, %s51
    %p53 = scmp.eq.s32.totalorder %s13, 0
    %p54 = por %p52, %p53
    %s55 = ssub.s32 %s14, %s26
    %s56 = ssub.s32 %s15, %s22
    %s57 = sor.u32 %s55, %s56
    %p58 = scmp.eq.s32.totalorder %s57, 0
    %s60 = sadd.s32 %s59, 1
    %s61 = scalar_select %p58, %s59, %s60
    %p64 = pneg %p58
    %p65 = scmp.eq.s32.totalorder %s7, 3
    %p66 = por %p64, %p65
    %p67 = scmp.ne.s32.totalorder %s59, %s62
    %p68 = scmp.eq.s32.totalorder %s7, 0
    %p69 = por %p67, %p68
    %p70 = scmp.ne.s32.totalorder %s59, %s62
    %p71 = scmp.eq.s32.totalorder %s12, 3
    %p72 = por %p70, %p71
    %p73 = scmp.ne.s32.totalorder %s62, %s63
    %p74 = scmp.eq.s32.totalorder %s12, 0
    %p75 = por %p73, %p74
    %p76 = scmp.ne.s32.totalorder %s62, %s63
    %p77 = scmp.eq.s32.totalorder %s13, 3
    %p78 = por %p76, %p77
    %p80 = scmp.ne.s32.totalorder %s63, %s79
    %p81 = scmp.eq.s32.totalorder %s13, 0
    %p82 = por %p80, %p81
    %p83 = scmp.le.s32.totalorder 1, %s7
    %p84 = scmp.lt.s32.totalorder %s7, 5
    %p85 = pnand %p83, %p84
    %p86 = pneg %p85
    // Predicated region
    $region9: #{maxpool2d_2x2.1} parent=5 // pred_check
      _
    $region10: #{maxpool2d_2x2.1} parent=5 // pred_check_branch
      %88 = sbr.rel (%p85) target = $region12
    $region11: #{maxpool2d_2x2.1} parent=5 // pred_region
      %s89 = ssub.s32 %s7, 1
    $region12: #{maxpool2d_2x2.1} parent=5 // pred_fallthru
      _
    %p90 = scmp.lt.s32.totalorder %s7, 4
    // Predicated region
    $region13: #{maxpool2d_2x2.1} parent=5 // pred_check
      %p91 = pneg %p90
    $region14: #{maxpool2d_2x2.1} parent=5 // pred_check_branch
      %93 = sbr.rel (%p91) target = $region16
    $region15: #{maxpool2d_2x2.1} parent=5 // pred_region
      // Predicated region
      $region17: #{maxpool2d_2x2.1} parent=15 // pred_check
        %p94 = pneg %p41
      $region18: #{maxpool2d_2x2.1} parent=15 // pred_check_branch
        %96 = sbr.rel (%p94) target = $region20
      $region19: #{maxpool2d_2x2.1} parent=15 // pred_region
        %s97 = smul.u32 2, %s15
        %p98 = scmp.lt.s32.totalorder %s14, 1
        %s99 = scalar_select %p98, %s14, 1
        %p100 = scmp.lt.s32.totalorder %s97, 3
        %s101 = scalar_select %p100, %s97, 3
        %s102 = smul.addr %s99, 4
        %s103 = sadd.s32 %s101, %s102
        %s104 = smul.addr %s103, 8
        %s105 = scalar_lea.vmem %s0, %s104
        %s106 = smul.u32 2, %s15
      $region20: #{maxpool2d_2x2.1} parent=15 // pred_fallthru
        _
    $region16: #{maxpool2d_2x2.1} parent=5 // pred_fallthru
      _
    %p107 = scmp.le.s32.totalorder 1, %s7
    %p108 = scmp.lt.s32.totalorder %s7, 5
    %p109 = pnand %p107, %p108
    %p110 = pneg %p109
    // Predicated region
    $region21: #{maxpool2d_2x2.1} parent=5 // pred_check
      _
    $region22: #{maxpool2d_2x2.1} parent=5 // pred_check_branch
      %112 = sbr.rel (%p109) target = $region24
    $region23: #{maxpool2d_2x2.1} parent=5 // pred_region
      %s113 = ssub.s32 %s7, 1
      %s114 = smul.u32 2, %s17
      %p115 = scmp.lt.s32.totalorder %s16, 1
      %s116 = scalar_select %p115, %s16, 1
      %p117 = scmp.lt.s32.totalorder %s114, 3
      %s118 = scalar_select %p117, %s114, 3
      %s119 = smul.addr %s116, 4
      %s120 = sadd.s32 %s118, %s119
      %s121 = smul.addr %s120, 8
      %s122 = scalar_lea.vmem %s0, %s121
      %p123 = pneg %p47
      %p124 = pneg %p44
      %p125 = pneg %p75
      %p126 = pneg %p72
      %s127 = smul.u32 2, %s17
      %p128 = scmp.lt.s32.totalorder %s16, 1
      %s129 = scalar_select %p128, %s16, 1
      %p130 = scmp.lt.s32.totalorder %s127, 3
      %s131 = scalar_select %p130, %s127, 3
      %s132 = smul.addr %s129, 4
      %s133 = sadd.s32 %s131, %s132
      %s134 = smul.addr %s133, 8
      %s135 = scalar_lea.vmem %s1, %s134
      %s136 = smul.u32 2, %s17
      %p137 = scmp.lt.s32.totalorder %s16, 1
      %s138 = scalar_select %p137, %s16, 1
      %p139 = scmp.lt.s32.totalorder %s136, 3
      %s140 = scalar_select %p139, %s136, 3
      %s141 = smul.addr %s138, 4
      %s142 = sadd.s32 %s140, %s141
      %s143 = smul.addr %s142, 8
      %s144 = scalar_lea.vmem %s0, %s143
      %s145 = smul.u32 2, %s17
      %s146 = smul.u32 2, %s17
      %p147 = scmp.lt.s32.totalorder %s16, 1
      %s148 = scalar_select %p147, %s16, 1
      %p149 = scmp.lt.s32.totalorder %s146, 3
      %s150 = scalar_select %p149, %s146, 3
      %s151 = smul.addr %s148, 4
      %s152 = sadd.s32 %s150, %s151
      %s153 = smul.addr %s152, 8
      %s154 = scalar_lea.vmem %s1, %s153
      %s155 = smul.u32 2, %s17
      %v156 = vld [vmem:[%s144] sm:$0xff]
      %v157 = vld [vmem:[%s144 + $0x8] sm:$0xff]
      %160 = vrot.lane.b32.xlu0 %v156, 112
      %v161 = vpop.permute.xlu0 %160
      %162 = vrot.lane.b32.xlu0 %v157, 112
      %v163 = vpop.permute.xlu0 %162
      %v166 = vmax.f32 %v156, %v161
      %v167 = vmax.f32 %v157, %v163
      %170 = vrot.lane.b32.xlu0 %v166, 127
      %v171 = vpop.permute.xlu0 %170
      %172 = vrot.lane.b32.xlu0 %v167, 127
      %v173 = vpop.permute.xlu0 %172
      %v176 = vmax.f32 %v166, %v171
      %v177 = vmax.f32 %v167, %v173
      %vm178 = vcmask 121856
      %179 = vst.msk [vmem:[%s154] sm:$0xff] %vm178, %v176
      %180 = vst.msk [vmem:[%s154 + $0x8] sm:$0xff] %vm178, %v177
      %s181 = smul.u32 2, %s17
      %p182 = scmp.lt.s32.totalorder %s16, 1
      %s183 = scalar_select %p182, %s16, 1
      %p184 = scmp.lt.s32.totalorder %s181, 3
      %s185 = scalar_select %p184, %s181, 3
      %s186 = smul.addr %s183, 4
      %s187 = sadd.s32 %s185, %s186
      %s188 = smul.addr %s187, 8
      %s189 = scalar_lea.vmem %s1, %s188
      // Predicated region
      $region25: #{maxpool2d_2x2.1} parent=23 // pred_check
        %p190 = pneg %p72
      $region26: #{maxpool2d_2x2.1} parent=23 // pred_check_branch
        %192 = sbr.rel (%p190) target = $region28
      $region27: #{maxpool2d_2x2.1} parent=23 // pred_region
        %s193 = smul.u32 2, %s17
      $region28: #{maxpool2d_2x2.1} parent=23 // pred_fallthru
        _
    $region24: #{maxpool2d_2x2.1} parent=5 // pred_fallthru
      _
    %p194 = scmp.le.s32.totalorder 2, %s7
    // Predicated region
    $region29: #{maxpool2d_2x2.1} parent=5 // pred_check
      %p195 = pneg %p194
    $region30: #{maxpool2d_2x2.1} parent=5 // pred_check_branch
      %197 = sbr.rel (%p195) target = $region32
    $region31: #{maxpool2d_2x2.1} parent=5 // pred_region
      %s198 = ssub.s32 %s7, 2
      // Predicated region
      $region33: #{maxpool2d_2x2.1} parent=31 // pred_check
        %p199 = pneg %p78
      $region34: #{maxpool2d_2x2.1} parent=31 // pred_check_branch
        %201 = sbr.rel (%p199) target = $region36
      $region35: #{maxpool2d_2x2.1} parent=31 // pred_region
        %s202 = smul.u32 2, %s19
        %p203 = scmp.lt.s32.totalorder %s18, 1
        %s204 = scalar_select %p203, %s18, 1
        %p205 = scmp.lt.s32.totalorder %s202, 3
        %s206 = scalar_select %p205, %s202, 3
        %s207 = smul.addr %s204, 4
        %s208 = sadd.s32 %s206, %s207
        %s209 = smul.addr %s208, 8
        %s210 = scalar_lea.vmem %s1, %s209
      $region36: #{maxpool2d_2x2.1} parent=31 // pred_fallthru
        _
    $region32: #{maxpool2d_2x2.1} parent=5 // pred_fallthru
      _
  $region6: #{maxpool2d_2x2.1} parent=0 // loop_footer
    %s11 = sadd.s32 1, %s7
  $region7: #{maxpool2d_2x2.1} parent=0 // loop_footer_branch
    %6 = sbr.rel target = $region3
  $region8: #{maxpool2d_2x2.1} parent=0 // loop_exit
    _

</llo_original>
